<compile_context>
chip_gen: v5e
topology: v5e:2x2
jax: 0.10.0
libtpu: 0.0.40
codegen_flags: <defaults>
</compile_context>

<pallas_src>
import functools

import numpy as np
import jax
import jax.numpy as jnp
from jax.experimental import pallas as pl
from jax.experimental.pallas import tpu as pltpu


def _build_relative_position_index(window_size):
    """Pure-numpy replication of the PyTorch __init__ index construction."""
    Wh, Ww = window_size
    num_relative_distance = (2 * Wh - 1) * (2 * Ww - 1) + 3

    coords_h = np.arange(Wh)
    coords_w = np.arange(Ww)
    # torch.meshgrid default is 'ij' indexing
    coords = np.stack(np.meshgrid(coords_h, coords_w, indexing="ij"))  # (2, Wh, Ww)
    coords_flatten = coords.reshape(2, -1)                             # (2, Wh*Ww)
    relative_coords = coords_flatten[:, :, None] - coords_flatten[:, None, :]  # (2, N, N)
    relative_coords = np.transpose(relative_coords, (1, 2, 0)).copy()  # (N, N, 2)
    relative_coords[:, :, 0] += Wh - 1
    relative_coords[:, :, 1] += Ww - 1
    relative_coords[:, :, 0] *= 2 * Ww - 1

    L = Wh * Ww + 1
    relative_position_index = np.zeros((L, L), dtype=relative_coords.dtype)
    relative_position_index[1:, 1:] = relative_coords.sum(-1)
    relative_position_index[0, 0:] = num_relative_distance - 3
    relative_position_index[0:, 0] = num_relative_distance - 2
    relative_position_index[0, 0] = num_relative_distance - 1
    return relative_position_index.astype(np.int32), num_relative_distance


def _rpb_gather_kernel(idx_ref, table_t_ref, out_ref, *, k_chunk):
    # idx_ref:     (1, tile_n)      int32  — lane-dense slice of flattened index
    # table_t_ref: (H_pad, D_pad)   float  — transposed, padded bias table
    # out_ref:     (H_pad, tile_n)  float  — gathered columns: table.T[:, idx]
    idx = idx_ref[...]                                   # (1, tile_n)
    d_pad = table_t_ref.shape[1]
    tile_n = idx.shape[1]

    # Slab iota is built once (k_chunk rows); per chunk only the (1, tile_n)
    # index row is shifted, keeping per-slab VALU work minimal.
    d_iota = jax.lax.broadcasted_iota(jnp.int32, (k_chunk, tile_n), 0)

    # Static K loop: each slab one-hot is consumed by its matmul immediately,
    # so no (D_pad x tile_n) intermediate ever round-trips VMEM.
    for c in range(d_pad // k_chunk):
        k0 = c * k_chunk
        onehot_t = (d_iota == (idx - k0)).astype(table_t_ref.dtype)   # (k_chunk, tile_n)
        partial = jnp.dot(
            table_t_ref[:, k0:k0 + k_chunk], onehot_t,
            preferred_element_type=jnp.float32,
        ).astype(out_ref.dtype)
        if c == 0:
            out_ref[...] = partial          # first slab: plain store
        else:
            out_ref[...] += partial         # later slabs add exact zeros elsewhere


def relative_position_bias_forward(table, rel_pos_index, window_size,
                                   *, force_pallas=False, tile_n=None):
    """Pallas implementation of RelativePositionBias.forward().

    table:         (num_relative_distance, num_heads)
    rel_pos_index: (L, L) int, L = Wh*Ww + 1
    returns:       (num_heads, L, L)
    """
    Wh, Ww = window_size
    L = Wh * Ww + 1
    D, H = table.shape
    N = L * L
    idx_flat = rel_pos_index.reshape(-1).astype(jnp.int32)   # (N,)

    # TODO(synk): re-benchmark the plain-XLA gather vs. the kernel at the
    # production shape (L=197) and tune this threshold.
    if not force_pallas and L < 100:
        return jnp.take(table, idx_flat, axis=0).T.reshape(H, L, L)

    # K-slab height of the one-hot; D padded to a whole number of slabs
    # (padded table rows are never selected since all indices are < D).
    k_chunk = 128 if D <= 128 else 256
    d_pad = pl.cdiv(D, k_chunk) * k_chunk

    # Lane-dense N tiles: large enough to amortize ~0.35us/step grid overhead,
    # small enough that the per-slab one-hot stays ~2 MiB and v7x's two
    # TensorCores both get grid steps at the production shape (N~38.8K -> 19).
    if tile_n is None:
        tile_n = 2048 if N >= 2048 else pl.cdiv(N, 128) * 128
    assert tile_n % 128 == 0
    n_pad = pl.cdiv(N, tile_n) * tile_n

    # Head (sublane) axis padded to a multiple of 8 -> unmasked stores for H=12.
    h_pad = pl.cdiv(H, 8) * 8

    # Lane-dense index row, zero-padded (index 0 is valid; extra cols sliced off).
    idx_row = jnp.pad(idx_flat, (0, n_pad - N)).reshape(1, n_pad)
    # Transposed table, zero-padded in H and D.
    table_t = jnp.pad(table.T, ((0, h_pad - H), (0, d_pad - D)))      # (H_pad, D_pad)

    itemsize = jnp.dtype(table.dtype).itemsize
    grid = (n_pad // tile_n,)
    cost = pl.CostEstimate(
        flops=2 * h_pad * d_pad * n_pad,
        transcendentals=0,
        bytes_accessed=(idx_row.size * 4
                        + table_t.size * itemsize
                        + h_pad * n_pad * itemsize),
    )

    out_t = pl.pallas_call(
        functools.partial(_rpb_gather_kernel, k_chunk=k_chunk),
        out_shape=jax.ShapeDtypeStruct((h_pad, n_pad), table.dtype),
        grid=grid,
        in_specs=[
            pl.BlockSpec((1, tile_n), lambda i: (0, i)),        # idx tile
            pl.BlockSpec((h_pad, d_pad), lambda i: (0, 0)),     # table stays resident
        ],
        out_specs=pl.BlockSpec((h_pad, tile_n), lambda i: (0, i)),
        compiler_params=pltpu.CompilerParams(
            dimension_semantics=("parallel",),
            vmem_limit_bytes=32 * 1024 * 1024,
        ),
        cost_estimate=cost,
    )(idx_row, table_t)

    # (H_pad, N_pad) -> (num_heads, L, L); already head-major, no transpose.
    return out_t[:H, :N].reshape(H, L, L)


if __name__ == "__main__":
    def reference(table, rel_pos_index, window_size):
        Wh, Ww = window_size
        L = Wh * Ww + 1
        H = table.shape[1]
        gathered = jnp.take(table, rel_pos_index.reshape(-1), axis=0)  # (N, H)
        return jnp.transpose(gathered.reshape(L, L, H), (2, 0, 1))

    key = jax.random.PRNGKey(0)
    k1, k2 = jax.random.split(key)

    # Case 1: window_size=(4,4), num_heads=8 — single K slab, single N tile.
    ws1, heads1 = (4, 4), 8
    idx1_np, d1 = _build_relative_position_index(ws1)
    idx1 = jnp.asarray(idx1_np)
    table1 = jax.random.normal(k1, (d1, heads1), dtype=jnp.float32)
    out1 = jax.block_until_ready(
        relative_position_bias_forward(table1, idx1, ws1, force_pallas=True))
    L1 = ws1[0] * ws1[1] + 1
    assert out1.shape == (heads1, L1, L1), out1.shape
    np.testing.assert_allclose(np.asarray(out1), np.asarray(reference(table1, idx1, ws1)),
                               rtol=1e-6, atol=1e-6)

    # Case 2: window_size=(9,9), num_heads=12 — exercises H padding (12->16),
    # multiple K slabs (D=292 -> 2 x 256) and a multi-step N grid (N=6724 -> 4 tiles).
    ws2, heads2 = (9, 9), 12
    idx2_np, d2 = _build_relative_position_index(ws2)
    idx2 = jnp.asarray(idx2_np)
    table2 = jax.random.normal(k2, (d2, heads2), dtype=jnp.float32)
    out2 = jax.block_until_ready(
        relative_position_bias_forward(table2, idx2, ws2, force_pallas=True))
    L2 = ws2[0] * ws2[1] + 1
    assert out2.shape == (heads2, L2, L2), out2.shape
    np.testing.assert_allclose(np.asarray(out2), np.asarray(reference(table2, idx2, ws2)),
                               rtol=1e-6, atol=1e-6)

    print("KERNEL_OK")
</pallas_src>

<mosaic_0001>
module attributes {stable_mosaic.version = 11 : i64} {
  func.func @_rpb_gather_kernel(%arg0: i32, %arg1: memref<1x384xi32, #tpu.memory_space<vmem>>, %arg2: memref<8x128xf32, #tpu.memory_space<vmem>>, %arg3: memref<8x384xf32, #tpu.memory_space<vmem>>) attributes {dimension_semantics = [#tpu.dimension_semantics<parallel>], iteration_bounds = array<i64: 1>, scalar_prefetch = 0 : i64, scratch_operands = 0 : i64, tpu.core_type = #tpu.core_type<tc>, window_params = [{transform_indices = @transform_0, window_bounds = array<i64: 1, 384>}, {pipeline_mode = #tpu.pipeline_mode<synchronous>, transform_indices = @transform_1, window_bounds = array<i64: 8, 128>}, {transform_indices = @transform_2, window_bounds = array<i64: 8, 384>}]} {
    %c0 = arith.constant 0 : index
    %c0_0 = arith.constant 0 : index
    %0 = vector.load %arg1[%c0, %c0_0] : memref<1x384xi32, #tpu.memory_space<vmem>>, vector<1x384xi32>
    %1 = tpu.iota {dimensions = array<i32: 0>} : vector<128x384xi32>
    %c0_i32 = arith.constant 0 : i32
    %2 = vector.broadcast %c0_i32 : i32 to vector<1x384xi32>
    %3 = arith.subi %0, %2 : vector<1x384xi32>
    %4 = vector.broadcast %3 : vector<1x384xi32> to vector<128x384xi32>
    %5 = arith.cmpi eq, %1, %4 : vector<128x384xi32>
    %6 = arith.extui %5 : vector<128x384xi1> to vector<128x384xi32>
    %7 = arith.sitofp %6 : vector<128x384xi32> to vector<128x384xf32>
    %c0_1 = arith.constant 0 : index
    %c0_2 = arith.constant 0 : index
    %8 = vector.load %arg2[%c0_1, %c0_2] : memref<8x128xf32, #tpu.memory_space<vmem>>, vector<8x128xf32>
    %cst = arith.constant dense<0.000000e+00> : vector<8x384xf32>
    %9 = tpu.matmul %8, %7, %cst {dimension_numbers = #tpu.dot_dimension_numbers<[1], [0], [0], [1], [0, 0, 1, 1], [], []>} : vector<8x128xf32>, vector<128x384xf32>, vector<8x384xf32> -> vector<8x384xf32>
    %c0_3 = arith.constant 0 : index
    %c0_4 = arith.constant 0 : index
    %10 = vector.load %arg3[%c0_3, %c0_4] : memref<8x384xf32, #tpu.memory_space<vmem>>, vector<8x384xf32>
    tpu.vector_store %arg3[%c0_3, %c0_4], %9 {strides = array<i32>} : memref<8x384xf32, #tpu.memory_space<vmem>>, vector<8x384xf32>,
    return
  }
  func.func @transform_0(%arg0: i32) -> (i32, i32) {
    %c0_i32 = arith.constant 0 : i32
    %c0_i32_0 = arith.constant 0 : i32
    return %c0_i32, %arg0 : i32, i32
  }
  func.func @transform_1(%arg0: i32) -> (i32, i32) {
    %c0_i32 = arith.constant 0 : i32
    %c0_i32_0 = arith.constant 0 : i32
    %c0_i32_1 = arith.constant 0 : i32
    return %c0_i32, %c0_i32_0 : i32, i32
  }
  func.func @transform_2(%arg0: i32) -> (i32, i32) {
    %c0_i32 = arith.constant 0 : i32
    %c0_i32_0 = arith.constant 0 : i32
    return %c0_i32, %arg0 : i32, i32
  }
}

</mosaic_0001>

<llo_original>
// kernel: tpu_custom_call.1
$region0: #{tpu_custom_call.1}
  #allocation0 [shape = 'u32[]', space=smem, size = 0x4, offset = 0x4, fixed_abs, tag = 'smem constant byte address 0x4 - core index']
  #allocation1 [shape = 'u32[72,128]{1,0:T(1,128)}', space=vmem, size = 0x9000, scoped, tag = 'internal scratch']
  %s0 = inlined_call_operand.hbm [shape: s32[1,384], index: 0, kind: input, shape index: {}]
  %s1 = inlined_call_operand.hbm [shape: f32[8,128], index: 1, kind: input, shape index: {}]
  %s2 = inlined_call_operand.hbm [shape: f32[8,384], index: 2, kind: output, shape index: {}]
  %s3 = sld [smem:[#allocation0]]
  $region26: #{tpu_custom_call.1} parent=0
    _
  %s5 = ssub.s32 1, %s3
  %s6 = scalar_select 0, %s5, %s3
  $region1: #{tpu_custom_call.1} parent=0
    #allocation2 [shape = 'u8[1536]{0}', space=vmem, size = 0x800, scoped, tag = 'input window, operand 0, single buffered']
    #allocation3 [shape = 's32[1]{0}', space=sflag, size = 0x4, scoped, tag = 'scoped memory for tpu_custom_call.1']
    #allocation4 [shape = 's32[1]{0}', space=sflag, size = 0x4, scoped, tag = 'scoped memory for tpu_custom_call.1']
    #allocation5 [shape = 'u8[4096]{0}', space=vmem, size = 0x1000, scoped, tag = 'input window, operand 1, single buffered']
    #allocation6 [shape = 's32[1]{0}', space=sflag, size = 0x4, scoped, tag = 'scoped memory for tpu_custom_call.1']
    #allocation7 [shape = 'u8[12288]{0}', space=vmem, size = 0x3000, scoped, tag = 'output window, operand 0, single buffered']
    %7 = vsyncpa [#allocation3], 0
    %8 = vsyncpa [#allocation6], 0
    %9 = vsyncpa [#allocation4], 0
    // Predicated region
    $region2: #{tpu_custom_call.1} parent=1 // pred_check
      _
    $region3: #{tpu_custom_call.1} parent=1 // pred_check_branch
      %11 = sbr.rel (0) target = $region5
    $region4: #{tpu_custom_call.1} parent=1 // pred_region
      %13 = vsyncadd [#allocation3], 0
      %s15 = sshll.u32 %s0, 4
      %s16 = int_to_ptr.hbm [resolvable:$true] %s15
      %s17 = sshll.u32 [#allocation2], 4
      %s18 = int_to_ptr.vmem [resolvable:$true] %s17
      %20 = dma.hbm_to_vmem [thread:$0]  %s16, 48, %s18, [#allocation3]
    $region5: #{tpu_custom_call.1} parent=1 // pred_fallthru
      _
    // Predicated region
    $region6: #{tpu_custom_call.1} parent=1 // pred_check
      _
    $region7: #{tpu_custom_call.1} parent=1 // pred_check_branch
      %22 = sbr.rel (0) target = $region9
    $region8: #{tpu_custom_call.1} parent=1 // pred_region
      %24 = vsyncadd [#allocation6], 0
      %s26 = sshll.u32 %s1, 4
      %s27 = int_to_ptr.hbm [resolvable:$true] %s26
      %s28 = sshll.u32 [#allocation5], 4
      %s29 = int_to_ptr.vmem [resolvable:$true] %s28
      %31 = dma.hbm_to_vmem [thread:$0]  %s27, 128, %s29, [#allocation6]
    $region9: #{tpu_custom_call.1} parent=1 // pred_fallthru
      _
    // Predicated region
    $region10: #{tpu_custom_call.1} parent=1 // pred_check
      _
    $region11: #{tpu_custom_call.1} parent=1 // pred_check_branch
      %33 = sbr.rel (0) target = $region13
    $region12: #{tpu_custom_call.1} parent=1 // pred_region
      %35 = dma.done [#allocation3], 48
    $region13: #{tpu_custom_call.1} parent=1 // pred_fallthru
      _
    // Predicated region
    $region14: #{tpu_custom_call.1} parent=1 // pred_check
      _
    $region15: #{tpu_custom_call.1} parent=1 // pred_check_branch
      %37 = sbr.rel (0) target = $region17
    $region16: #{tpu_custom_call.1} parent=1 // pred_region
      %39 = dma.done [#allocation6], 128
    $region17: #{tpu_custom_call.1} parent=1 // pred_fallthru
      _
    %v40 = vld [vmem:[#allocation2] sm:$0x7]
    %v41 = vlaneseq
    %v42 = vshrl.u32 %v41, 7
    %v43 = vadd.s32 %v42, 8
    %v44 = vadd.s32 %v42, 16
    %v45 = vadd.s32 %v42, 24
    %v46 = vadd.s32 %v42, 32
    %v47 = vadd.s32 %v42, 40
    %v48 = vadd.s32 %v42, 48
    %v49 = vadd.s32 %v42, 56
    %v50 = vadd.s32 %v42, 64
    %v51 = vadd.s32 %v42, 72
    %v52 = vadd.s32 %v42, 80
    %v53 = vadd.s32 %v42, 88
    %v54 = vadd.s32 %v42, 96
    %v55 = vadd.s32 %v42, 104
    %v56 = vadd.s32 %v42, 112
    %v57 = vadd.s32 %v42, 120
    %v58 = vperm.slane %v40, 0
    %v59 = vperm.slane %v40, 1
    %v60 = vperm.slane %v40, 2
    %vm61 = vcmp.eq.s32.totalorder %v42, %v58
    %vm62 = vcmp.eq.s32.totalorder %v42, %v59
    %vm63 = vcmp.eq.s32.totalorder %v42, %v60
    %vm64 = vcmp.eq.s32.totalorder %v43, %v58
    %vm65 = vcmp.eq.s32.totalorder %v43, %v59
    %vm66 = vcmp.eq.s32.totalorder %v43, %v60
    %vm67 = vcmp.eq.s32.totalorder %v44, %v58
    %vm68 = vcmp.eq.s32.totalorder %v44, %v59
    %vm69 = vcmp.eq.s32.totalorder %v44, %v60
    %vm70 = vcmp.eq.s32.totalorder %v45, %v58
    %vm71 = vcmp.eq.s32.totalorder %v45, %v59
    %vm72 = vcmp.eq.s32.totalorder %v45, %v60
    %vm73 = vcmp.eq.s32.totalorder %v46, %v58
    %vm74 = vcmp.eq.s32.totalorder %v46, %v59
    %vm75 = vcmp.eq.s32.totalorder %v46, %v60
    %vm76 = vcmp.eq.s32.totalorder %v47, %v58
    %vm77 = vcmp.eq.s32.totalorder %v47, %v59
    %vm78 = vcmp.eq.s32.totalorder %v47, %v60
    %vm79 = vcmp.eq.s32.totalorder %v48, %v58
    %vm80 = vcmp.eq.s32.totalorder %v48, %v59
    %vm81 = vcmp.eq.s32.totalorder %v48, %v60
    %vm82 = vcmp.eq.s32.totalorder %v49, %v58
    %vm83 = vcmp.eq.s32.totalorder %v49, %v59
    %vm84 = vcmp.eq.s32.totalorder %v49, %v60
    %vm85 = vcmp.eq.s32.totalorder %v50, %v58
    %vm86 = vcmp.eq.s32.totalorder %v50, %v59
    %vm87 = vcmp.eq.s32.totalorder %v50, %v60
    %vm88 = vcmp.eq.s32.totalorder %v51, %v58
    %vm89 = vcmp.eq.s32.totalorder %v51, %v59
    %vm90 = vcmp.eq.s32.totalorder %v51, %v60
    %vm91 = vcmp.eq.s32.totalorder %v52, %v58
    %vm92 = vcmp.eq.s32.totalorder %v52, %v59
    %vm93 = vcmp.eq.s32.totalorder %v52, %v60
    %vm94 = vcmp.eq.s32.totalorder %v53, %v58
    %vm95 = vcmp.eq.s32.totalorder %v53, %v59
    %vm96 = vcmp.eq.s32.totalorder %v53, %v60
    %vm97 = vcmp.eq.s32.totalorder %v54, %v58
    %vm98 = vcmp.eq.s32.totalorder %v54, %v59
    %vm99 = vcmp.eq.s32.totalorder %v54, %v60
    %vm100 = vcmp.eq.s32.totalorder %v55, %v58
    %vm101 = vcmp.eq.s32.totalorder %v55, %v59
    %vm102 = vcmp.eq.s32.totalorder %v55, %v60
    %vm103 = vcmp.eq.s32.totalorder %v56, %v58
    %vm104 = vcmp.eq.s32.totalorder %v56, %v59
    %vm105 = vcmp.eq.s32.totalorder %v56, %v60
    %vm106 = vcmp.eq.s32.totalorder %v57, %v58
    %vm107 = vcmp.eq.s32.totalorder %v57, %v59
    %vm108 = vcmp.eq.s32.totalorder %v57, %v60
    %v109 = vsel %vm61, 1, 0
    %v110 = vsel %vm62, 1, 0
    %v111 = vsel %vm63, 1, 0
    %v112 = vsel %vm64, 1, 0
    %v113 = vsel %vm65, 1, 0
    %v114 = vsel %vm66, 1, 0
    %v115 = vsel %vm67, 1, 0
    %v116 = vsel %vm68, 1, 0
    %v117 = vsel %vm69, 1, 0
    %v118 = vsel %vm70, 1, 0
    %v119 = vsel %vm71, 1, 0
    %v120 = vsel %vm72, 1, 0
    %v121 = vsel %vm73, 1, 0
    %v122 = vsel %vm74, 1, 0
    %v123 = vsel %vm75, 1, 0
    %v124 = vsel %vm76, 1, 0
    %v125 = vsel %vm77, 1, 0
    %v126 = vsel %vm78, 1, 0
    %v127 = vsel %vm79, 1, 0
    %v128 = vsel %vm80, 1, 0
    %v129 = vsel %vm81, 1, 0
    %v130 = vsel %vm82, 1, 0
    %v131 = vsel %vm83, 1, 0
    %v132 = vsel %vm84, 1, 0
    %v133 = vsel %vm85, 1, 0
    %v134 = vsel %vm86, 1, 0
    %v135 = vsel %vm87, 1, 0
    %v136 = vsel %vm88, 1, 0
    %v137 = vsel %vm89, 1, 0
    %v138 = vsel %vm90, 1, 0
    %v139 = vsel %vm91, 1, 0
    %v140 = vsel %vm92, 1, 0
    %v141 = vsel %vm93, 1, 0
    %v142 = vsel %vm94, 1, 0
    %v143 = vsel %vm95, 1, 0
    %v144 = vsel %vm96, 1, 0
    %v145 = vsel %vm97, 1, 0
    %v146 = vsel %vm98, 1, 0
    %v147 = vsel %vm99, 1, 0
    %v148 = vsel %vm100, 1, 0
    %v149 = vsel %vm101, 1, 0
    %v150 = vsel %vm102, 1, 0
    %v151 = vsel %vm103, 1, 0
    %v152 = vsel %vm104, 1, 0
    %v153 = vsel %vm105, 1, 0
    %v154 = vsel %vm106, 1, 0
    %v155 = vsel %vm107, 1, 0
    %v156 = vsel %vm108, 1, 0
    %v157 = vcvt.s32.f32 %v109
    %v158 = vcvt.s32.f32 %v110
    %v159 = vcvt.s32.f32 %v111
    %v160 = vcvt.s32.f32 %v112
    %v161 = vcvt.s32.f32 %v113
    %v162 = vcvt.s32.f32 %v114
    %v163 = vcvt.s32.f32 %v115
    %v164 = vcvt.s32.f32 %v116
    %v165 = vcvt.s32.f32 %v117
    %v166 = vcvt.s32.f32 %v118
    %v167 = vcvt.s32.f32 %v119
    %v168 = vcvt.s32.f32 %v120
    %v169 = vcvt.s32.f32 %v121
    %v170 = vcvt.s32.f32 %v122
    %v171 = vcvt.s32.f32 %v123
    %v172 = vcvt.s32.f32 %v124
    %v173 = vcvt.s32.f32 %v125
    %v174 = vcvt.s32.f32 %v126
    %v175 = vcvt.s32.f32 %v127
    %v176 = vcvt.s32.f32 %v128
    %v177 = vcvt.s32.f32 %v129
    %v178 = vcvt.s32.f32 %v130
    %v179 = vcvt.s32.f32 %v131
    %v180 = vcvt.s32.f32 %v132
    %v181 = vcvt.s32.f32 %v133
    %v182 = vcvt.s32.f32 %v134
    %v183 = vcvt.s32.f32 %v135
    %v184 = vcvt.s32.f32 %v136
    %v185 = vcvt.s32.f32 %v137
    %v186 = vcvt.s32.f32 %v138
    %v187 = vcvt.s32.f32 %v139
    %v188 = vcvt.s32.f32 %v140
    %v189 = vcvt.s32.f32 %v141
    %v190 = vcvt.s32.f32 %v142
    %v191 = vcvt.s32.f32 %v143
    %v192 = vcvt.s32.f32 %v144
    %v193 = vcvt.s32.f32 %v145
    %v194 = vcvt.s32.f32 %v146
    %v195 = vcvt.s32.f32 %v147
    %v196 = vcvt.s32.f32 %v148
    %v197 = vcvt.s32.f32 %v149
    %v198 = vcvt.s32.f32 %v150
    %v199 = vcvt.s32.f32 %v151
    %v200 = vcvt.s32.f32 %v152
    %v201 = vcvt.s32.f32 %v153
    %v202 = vcvt.s32.f32 %v154
    %v203 = vcvt.s32.f32 %v155
    %v204 = vcvt.s32.f32 %v156
    %v205 = vld [vmem:[#allocation5] sm:$0xff]
    %206 = vmatpush.msra.mxu0 %v202
    %207 = vmatpush.msra.mxu0 %v199
    %208 = vmatpush.msra.mxu0 %v196
    %209 = vmatpush.msra.mxu0 %v193
    %210 = vmatpush.msra.mxu0 %v190
    %211 = vmatpush.msra.mxu0 %v187
    %212 = vmatpush.msra.mxu0 %v184
    %213 = vmatpush.msra.mxu0 %v181
    %214 = vmatpush.msra.mxu0 %v178
    %215 = vmatpush.msra.mxu0 %v175
    %216 = vmatpush.msra.mxu0 %v172
    %217 = vmatpush.msra.mxu0 %v169
    %218 = vmatpush.msra.mxu0 %v166
    %219 = vmatpush.msra.mxu0 %v163
    %220 = vmatpush.msra.mxu0 %v160
    %221 = vmatpush.msra.mxu0 %v157
    %222 = vmatmul.f32.gmra.mxu0 %v205
    %v223 = vpop.f32.mrf.mxu0
    %v224 = vadd.f32 0.0, %v223
    %225 = vdwg.mxu0
    %226 = vmatpush.msra.mxu0 %v203
    %227 = vmatpush.msra.mxu0 %v200
    %228 = vmatpush.msra.mxu0 %v197
    %229 = vmatpush.msra.mxu0 %v194
    %230 = vmatpush.msra.mxu0 %v191
    %231 = vmatpush.msra.mxu0 %v188
    %232 = vmatpush.msra.mxu0 %v185
    %233 = vmatpush.msra.mxu0 %v182
    %234 = vmatpush.msra.mxu0 %v179
    %235 = vmatpush.msra.mxu0 %v176
    %236 = vmatpush.msra.mxu0 %v173
    %237 = vmatpush.msra.mxu0 %v170
    %238 = vmatpush.msra.mxu0 %v167
    %239 = vmatpush.msra.mxu0 %v164
    %240 = vmatpush.msra.mxu0 %v161
    %241 = vmatpush.msra.mxu0 %v158
    %242 = vmatmul.f32.gmra.mxu0 %v205
    %v243 = vpop.f32.mrf.mxu0
    %v244 = vadd.f32 0.0, %v243
    %245 = vdwg.mxu0
    %246 = vmatpush.msra.mxu0 %v204
    %247 = vmatpush.msra.mxu0 %v201
    %248 = vmatpush.msra.mxu0 %v198
    %249 = vmatpush.msra.mxu0 %v195
    %250 = vmatpush.msra.mxu0 %v192
    %251 = vmatpush.msra.mxu0 %v189
    %252 = vmatpush.msra.mxu0 %v186
    %253 = vmatpush.msra.mxu0 %v183
    %254 = vmatpush.msra.mxu0 %v180
    %255 = vmatpush.msra.mxu0 %v177
    %256 = vmatpush.msra.mxu0 %v174
    %257 = vmatpush.msra.mxu0 %v171
    %258 = vmatpush.msra.mxu0 %v168
    %259 = vmatpush.msra.mxu0 %v165
    %260 = vmatpush.msra.mxu0 %v162
    %261 = vmatpush.msra.mxu0 %v159
    %262 = vmatmul.f32.gmra.mxu0 %v205
    %v263 = vpop.f32.mrf.mxu0
    %v264 = vadd.f32 0.0, %v263
    %265 = vdwg.mxu0
    %266 = vst [vmem:[#allocation7] sm:$0xff] %v224
    %267 = vst [vmem:[#allocation7 + $0x8] sm:$0xff] %v244
    %268 = vst [vmem:[#allocation7 + $0x10] sm:$0xff] %v264
    // Predicated region
    $region18: #{tpu_custom_call.1} parent=1 // pred_check
      _
    $region19: #{tpu_custom_call.1} parent=1 // pred_check_branch
      %270 = sbr.rel (0) target = $region21
    $region20: #{tpu_custom_call.1} parent=1 // pred_region
      %272 = vsyncadd [#allocation4], 0
      %s274 = sshll.u32 [#allocation7], 4
      %s275 = int_to_ptr.vmem [resolvable:$true] %s274
      %s276 = sshll.u32 %s2, 4
      %s277 = int_to_ptr.hbm [resolvable:$true] %s276
      %279 = dma.vmem_to_hbm [thread:$0]  %s275, 384, %s277, [#allocation4]
    $region21: #{tpu_custom_call.1} parent=1 // pred_fallthru
      _
    // Predicated region
    $region22: #{tpu_custom_call.1} parent=1 // pred_check
      _
    $region23: #{tpu_custom_call.1} parent=1 // pred_check_branch
      %281 = sbr.rel (0) target = $region25
    $region24: #{tpu_custom_call.1} parent=1 // pred_region
      %283 = dma.done [#allocation4], 384
    $region25: #{tpu_custom_call.1} parent=1 // pred_fallthru
      _
    %284 = vsyncpa [#allocation3], 1
    %285 = vsyncpa [#allocation6], 1
    %286 = vsyncpa [#allocation4], 1

</llo_original>
